<compile_context>
chip_gen: v5e
topology: v5e:2x2
jax: 0.10.0
libtpu: 0.0.40
codegen_flags: <defaults>
</compile_context>

<pallas_src>
import jax
import jax.numpy as jnp
from jax.experimental import pallas as pl
from jax.experimental.pallas import tpu as pltpu


def _forward_block(x_ref, w1_ref, b1_ref, w2_ref, b2_ref, wh_ref, bh_ref):
    """One (batch_tile, D) block of the forward pass; all accumulation in f32."""
    x = x_ref[...]                                     # (bt, D), f32 or bf16
    # bottle[0] + ReLU: Linear(D -> D/4)
    h = jnp.dot(x, w1_ref[...], preferred_element_type=jnp.float32) + b1_ref[...]
    h = jnp.maximum(h, 0.0)
    # bottle[2]: Linear(D/4 -> D)
    f = (jnp.dot(h.astype(w2_ref.dtype), w2_ref[...],
                 preferred_element_type=jnp.float32) + b2_ref[...])
    # residual kept in f32 (cheap elementwise, exact add)
    z = x.astype(jnp.float32) + f
    # head: Dropout (identity in eval mode) + Linear(D -> Cp)
    # TODO(synk): training-mode Dropout(0.5) not implemented (eval semantics).
    out = (jnp.dot(z.astype(wh_ref.dtype), wh_ref[...],
                   preferred_element_type=jnp.float32) + bh_ref[...])
    return out, z, f


def classifier_kernel_with_f(x_ref, w1_ref, b1_ref, w2_ref, b2_ref, wh_ref, bh_ref,
                             out_ref, z_ref, f_ref):
    out, z, f = _forward_block(x_ref, w1_ref, b1_ref, w2_ref, b2_ref, wh_ref, bh_ref)
    out_ref[...] = out.astype(out_ref.dtype)
    z_ref[...] = z.astype(z_ref.dtype)
    f_ref[...] = f.astype(f_ref.dtype)


def classifier_kernel_no_f(x_ref, w1_ref, b1_ref, w2_ref, b2_ref, wh_ref, bh_ref,
                           out_ref, z_ref):
    out, z, _ = _forward_block(x_ref, w1_ref, b1_ref, w2_ref, b2_ref, wh_ref, bh_ref)
    out_ref[...] = out.astype(out_ref.dtype)
    z_ref[...] = z.astype(z_ref.dtype)


def _pick_batch_tile(B, align, requested, cap, min_steps):
    """Sublane-aligned tile that divides the (minimally aligned) batch and
    gives >= min_steps grid iterations when the batch is large enough."""
    Bp = -(-B // align) * align                       # minimal alignment pad only
    if requested is not None:
        bt = min(requested, cap, Bp)
    else:
        bt = min(cap, Bp, max(align, -(-B // min_steps)))
    bt = max(align, -(-bt // align) * align)          # round up to 8/16 sublanes
    bt = min(bt, Bp)
    while Bp % bt != 0:                               # largest aligned divisor <= bt
        bt -= align
    return bt, Bp


def image_classifier_forward(x, w1, b1, w2, b2, wh, bh, *,
                             batch_tile=None, return_f=False,
                             compute_dtype=jnp.bfloat16, out_dtype=None,
                             pad_head=True, min_grid_steps=4):
    """x: (B, D).  Weights pre-transposed to (in, out); biases (1, out).

    Returns (out, z, f).  f is None when return_f=False; it can be recovered
    as z - x only when z is stored in float32 (out_dtype=f32).
    """
    B, D = x.shape
    Dq = w1.shape[1]
    C = wh.shape[1]
    if out_dtype is None:
        out_dtype = compute_dtype

    # Lane-pad the head so `out` stores are 128-lane dense (switchable).
    Cp = (-(-C // 128) * 128) if pad_head else C
    if Cp != C:
        wh = jnp.pad(wh, ((0, 0), (0, Cp - C)))
        bh = jnp.pad(bh, ((0, 0), (0, Cp - C)))

    # bf16 (default) halves the x/weight read stream; MXU still accumulates f32
    # and all bias / residual math stays f32.
    x_in = x.astype(compute_dtype)
    w1 = w1.astype(compute_dtype)
    w2 = w2.astype(compute_dtype)
    wh = wh.astype(compute_dtype)
    b1 = b1.astype(jnp.float32)
    b2 = b2.astype(jnp.float32)
    bh = bh.astype(jnp.float32)

    # Batch tiling: >=4 grid steps, sublane aligned, dividing the batch so no
    # pad/slice HBM copies occur for aligned B.  Cap keeps the f32 temporaries
    # plus double-buffered I/O inside v7x's 64 MiB VMEM.
    align = 16 if (compute_dtype == jnp.bfloat16 or out_dtype == jnp.bfloat16) else 8
    cap = 1024 if return_f else 2048
    bt, Bp = _pick_batch_tile(B, align, batch_tile, cap, min_grid_steps)
    if Bp != B:                                       # only for non-8/16-aligned B
        x_in = jnp.pad(x_in, ((0, Bp - B), (0, 0)))
    grid = (Bp // bt,)

    rep = lambda shape: pl.BlockSpec(shape, lambda i: (0, 0))   # resident block
    in_specs = [
        pl.BlockSpec((bt, D), lambda i: (i, 0)),   # x
        rep((D, Dq)), rep((1, Dq)),                # W1, b1
        rep((Dq, D)), rep((1, D)),                 # W2, b2
        rep((D, Cp)), rep((1, Cp)),                # Wh, bh
    ]
    out_shape = [
        jax.ShapeDtypeStruct((Bp, Cp), out_dtype),     # out
        jax.ShapeDtypeStruct((Bp, D), out_dtype),      # z = x + f
    ]
    out_specs = [
        pl.BlockSpec((bt, Cp), lambda i: (i, 0)),
        pl.BlockSpec((bt, D), lambda i: (i, 0)),
    ]
    kernel = classifier_kernel_no_f
    if return_f:
        out_shape.append(jax.ShapeDtypeStruct((Bp, D), out_dtype))   # f
        out_specs.append(pl.BlockSpec((bt, D), lambda i: (i, 0)))
        kernel = classifier_kernel_with_f

    results = pl.pallas_call(
        kernel,
        out_shape=tuple(out_shape),
        grid_spec=pltpu.PrefetchScalarGridSpec(
            num_scalar_prefetch=0,
            grid=grid,
            in_specs=in_specs,
            out_specs=out_specs,
        ),
        compiler_params=pltpu.CompilerParams(
            dimension_semantics=("parallel",),
            vmem_limit_bytes=32 * 1024 * 1024,
        ),
    )(x_in, w1, b1, w2, b2, wh, bh)

    out, z = results[0], results[1]
    f = results[2] if return_f else None
    if Bp != B:
        out, z = out[:B], z[:B]
        f = f[:B] if return_f else None
    if Cp != C:
        out = out[:, :C]
    return out, z, f


def init_params(key, bottle_dim, num_classes, if_zero=True):
    """Deterministic init matching the PyTorch __init__ (weights stored as (in, out))."""
    k1, k2, k3 = jax.random.split(key, 3)
    Dq = bottle_dim // 4
    # bottle[0]: weight ~ N(0, 0.005), bias = 0.1
    w1 = 0.005 * jax.random.normal(k1, (bottle_dim, Dq), jnp.float32)
    b1 = jnp.full((1, Dq), 0.1, jnp.float32)
    # bottle[2]
    if if_zero:
        w2 = jnp.zeros((Dq, bottle_dim), jnp.float32)
        b2 = jnp.zeros((1, bottle_dim), jnp.float32)
    else:
        w2 = 0.005 * jax.random.normal(k3, (Dq, bottle_dim), jnp.float32)
        b2 = jnp.full((1, bottle_dim), 0.1, jnp.float32)
    # head[1]: weight ~ N(0, 0.01), bias = 0
    wh = 0.01 * jax.random.normal(k2, (bottle_dim, num_classes), jnp.float32)
    bh = jnp.zeros((1, num_classes), jnp.float32)
    return w1, b1, w2, b2, wh, bh


if __name__ == "__main__":
    bottle_dim = 256
    num_classes = 16
    batch = 256            # auto tile -> bt=64, grid=(4,): pipelined, no pad/slice

    key = jax.random.PRNGKey(0)
    kx, kp = jax.random.split(key)
    x = jax.random.normal(kx, (batch, bottle_dim), jnp.float32)
    # if_zero=False so the bottleneck branch (f) is non-trivial for the check
    params = init_params(kp, bottle_dim, num_classes, if_zero=False)
    w1, b1, w2, b2, wh, bh = params

    # pure-JAX f32 reference
    h_ref = jnp.maximum(x @ w1 + b1, 0.0)
    f_ref = h_ref @ w2 + b2
    z_ref = x + f_ref
    out_ref = z_ref @ wh + bh

    # (1) exact module semantics: f32 compute/storage, full (out, z, f) tuple
    out1, z1, f1 = image_classifier_forward(
        x, *params, return_f=True,
        compute_dtype=jnp.float32, out_dtype=jnp.float32)
    jax.block_until_ready((out1, z1, f1))
    assert out1.shape == (batch, num_classes)
    assert jnp.allclose(out1, out_ref, atol=1e-4, rtol=1e-4)
    assert jnp.allclose(z1, z_ref, atol=1e-4, rtol=1e-4)
    assert jnp.allclose(f1, f_ref, atol=1e-4, rtol=1e-4)

    # (2) default bandwidth-optimized path: bf16 I/O, no f writeback
    out2, z2, f2 = image_classifier_forward(x, *params)
    jax.block_until_ready((out2, z2))
    assert f2 is None
    assert out2.dtype == jnp.bfloat16 and z2.dtype == jnp.bfloat16
    assert jnp.allclose(out2.astype(jnp.float32), out_ref, atol=5e-2, rtol=5e-2)
    assert jnp.allclose(z2.astype(jnp.float32), z_ref, atol=5e-2, rtol=5e-2)

    # (3) unpadded-head / explicit-tile variant (v5e/v6e bandwidth option);
    #     f32 z so f = z - x recovery is exact.
    out3, z3, _ = image_classifier_forward(
        x, *params, batch_tile=64, pad_head=False,
        compute_dtype=jnp.float32, out_dtype=jnp.float32)
    jax.block_until_ready((out3, z3))
    assert out3.shape == (batch, num_classes)
    assert jnp.allclose(out3, out_ref, atol=1e-4, rtol=1e-4)
    assert jnp.allclose(z3 - x, f_ref, atol=1e-4, rtol=1e-4)

    print("KERNEL_OK")
</pallas_src>

<mosaic_0001>
module attributes {stable_mosaic.version = 11 : i64} {
  func.func @classifier_kernel_with_f(%arg0: i32, %arg1: memref<64x256xf32, #tpu.memory_space<vmem>>, %arg2: memref<256x64xf32, #tpu.memory_space<vmem>>, %arg3: memref<1x64xf32, #tpu.memory_space<vmem>>, %arg4: memref<64x256xf32, #tpu.memory_space<vmem>>, %arg5: memref<1x256xf32, #tpu.memory_space<vmem>>, %arg6: memref<256x128xf32, #tpu.memory_space<vmem>>, %arg7: memref<1x128xf32, #tpu.memory_space<vmem>>, %arg8: memref<64x128xf32, #tpu.memory_space<vmem>>, %arg9: memref<64x256xf32, #tpu.memory_space<vmem>>, %arg10: memref<64x256xf32, #tpu.memory_space<vmem>>) attributes {dimension_semantics = [#tpu.dimension_semantics<parallel>], iteration_bounds = array<i64: 4>, scalar_prefetch = 0 : i64, scratch_operands = 0 : i64, tpu.core_type = #tpu.core_type<tc>, window_params = [{transform_indices = @transform_0, window_bounds = array<i64: 64, 256>}, {pipeline_mode = #tpu.pipeline_mode<synchronous>, transform_indices = @transform_1, window_bounds = array<i64: 256, 64>}, {pipeline_mode = #tpu.pipeline_mode<synchronous>, transform_indices = @transform_2, window_bounds = array<i64: 1, 64>}, {pipeline_mode = #tpu.pipeline_mode<synchronous>, transform_indices = @transform_3, window_bounds = array<i64: 64, 256>}, {pipeline_mode = #tpu.pipeline_mode<synchronous>, transform_indices = @transform_4, window_bounds = array<i64: 1, 256>}, {pipeline_mode = #tpu.pipeline_mode<synchronous>, transform_indices = @transform_5, window_bounds = array<i64: 256, 128>}, {pipeline_mode = #tpu.pipeline_mode<synchronous>, transform_indices = @transform_6, window_bounds = array<i64: 1, 128>}, {transform_indices = @transform_7, window_bounds = array<i64: 64, 128>}, {transform_indices = @transform_8, window_bounds = array<i64: 64, 256>}, {transform_indices = @transform_9, window_bounds = array<i64: 64, 256>}]} {
    %c0 = arith.constant 0 : index
    %c0_0 = arith.constant 0 : index
    %0 = vector.load %arg1[%c0, %c0_0] : memref<64x256xf32, #tpu.memory_space<vmem>>, vector<64x256xf32>
    %c0_1 = arith.constant 0 : index
    %c0_2 = arith.constant 0 : index
    %1 = vector.load %arg2[%c0_1, %c0_2] : memref<256x64xf32, #tpu.memory_space<vmem>>, vector<256x64xf32>
    %cst = arith.constant dense<0.000000e+00> : vector<64x64xf32>
    %2 = tpu.matmul %0, %1, %cst {dimension_numbers = #tpu.dot_dimension_numbers<[1], [0], [0], [1], [0, 0, 1, 1], [], []>} : vector<64x256xf32>, vector<256x64xf32>, vector<64x64xf32> -> vector<64x64xf32>
    %c0_3 = arith.constant 0 : index
    %c0_4 = arith.constant 0 : index
    %3 = vector.load %arg3[%c0_3, %c0_4] : memref<1x64xf32, #tpu.memory_space<vmem>>, vector<1x64xf32>
    %4 = vector.broadcast %3 : vector<1x64xf32> to vector<64x64xf32>
    %5 = arith.addf %2, %4 : vector<64x64xf32>
    %cst_5 = arith.constant 0.000000e+00 : f32
    %6 = vector.broadcast %cst_5 : f32 to vector<64x64xf32>
    %7 = arith.maximumf %5, %6 : vector<64x64xf32>
    %c0_6 = arith.constant 0 : index
    %c0_7 = arith.constant 0 : index
    %8 = vector.load %arg4[%c0_6, %c0_7] : memref<64x256xf32, #tpu.memory_space<vmem>>, vector<64x256xf32>
    %cst_8 = arith.constant dense<0.000000e+00> : vector<64x256xf32>
    %9 = tpu.matmul %7, %8, %cst_8 {dimension_numbers = #tpu.dot_dimension_numbers<[1], [0], [0], [1], [0, 0, 1, 1], [], []>} : vector<64x64xf32>, vector<64x256xf32>, vector<64x256xf32> -> vector<64x256xf32>
    %c0_9 = arith.constant 0 : index
    %c0_10 = arith.constant 0 : index
    %10 = vector.load %arg5[%c0_9, %c0_10] : memref<1x256xf32, #tpu.memory_space<vmem>>, vector<1x256xf32>
    %11 = vector.broadcast %10 : vector<1x256xf32> to vector<64x256xf32>
    %12 = arith.addf %9, %11 : vector<64x256xf32>
    %13 = arith.addf %0, %12 : vector<64x256xf32>
    %c0_11 = arith.constant 0 : index
    %c0_12 = arith.constant 0 : index
    %14 = vector.load %arg6[%c0_11, %c0_12] : memref<256x128xf32, #tpu.memory_space<vmem>>, vector<256x128xf32>
    %cst_13 = arith.constant dense<0.000000e+00> : vector<64x128xf32>
    %15 = tpu.matmul %13, %14, %cst_13 {dimension_numbers = #tpu.dot_dimension_numbers<[1], [0], [0], [1], [0, 0, 1, 1], [], []>} : vector<64x256xf32>, vector<256x128xf32>, vector<64x128xf32> -> vector<64x128xf32>
    %c0_14 = arith.constant 0 : index
    %c0_15 = arith.constant 0 : index
    %16 = vector.load %arg7[%c0_14, %c0_15] : memref<1x128xf32, #tpu.memory_space<vmem>>, vector<1x128xf32>
    %17 = vector.broadcast %16 : vector<1x128xf32> to vector<64x128xf32>
    %18 = arith.addf %15, %17 : vector<64x128xf32>
    %c0_16 = arith.constant 0 : index
    %c0_17 = arith.constant 0 : index
    %19 = vector.load %arg8[%c0_16, %c0_17] : memref<64x128xf32, #tpu.memory_space<vmem>>, vector<64x128xf32>
    tpu.vector_store %arg8[%c0_16, %c0_17], %18 {strides = array<i32>} : memref<64x128xf32, #tpu.memory_space<vmem>>, vector<64x128xf32>,
    %c0_18 = arith.constant 0 : index
    %c0_19 = arith.constant 0 : index
    %20 = vector.load %arg9[%c0_18, %c0_19] : memref<64x256xf32, #tpu.memory_space<vmem>>, vector<64x256xf32>
    tpu.vector_store %arg9[%c0_18, %c0_19], %13 {strides = array<i32>} : memref<64x256xf32, #tpu.memory_space<vmem>>, vector<64x256xf32>,
    %c0_20 = arith.constant 0 : index
    %c0_21 = arith.constant 0 : index
    %21 = vector.load %arg10[%c0_20, %c0_21] : memref<64x256xf32, #tpu.memory_space<vmem>>, vector<64x256xf32>
    tpu.vector_store %arg10[%c0_20, %c0_21], %12 {strides = array<i32>} : memref<64x256xf32, #tpu.memory_space<vmem>>, vector<64x256xf32>,
    return
  }
  func.func @transform_0(%arg0: i32) -> (i32, i32) {
    %c0_i32 = arith.constant 0 : i32
    %c0_i32_0 = arith.constant 0 : i32
    return %arg0, %c0_i32 : i32, i32
  }
  func.func @transform_1(%arg0: i32) -> (i32, i32) {
    %c0_i32 = arith.constant 0 : i32
    %c0_i32_0 = arith.constant 0 : i32
    %c0_i32_1 = arith.constant 0 : i32
    return %c0_i32, %c0_i32_0 : i32, i32
  }
  func.func @transform_2(%arg0: i32) -> (i32, i32) {
    %c0_i32 = arith.constant 0 : i32
    %c0_i32_0 = arith.constant 0 : i32
    %c0_i32_1 = arith.constant 0 : i32
    return %c0_i32, %c0_i32_0 : i32, i32
  }
  func.func @transform_3(%arg0: i32) -> (i32, i32) {
    %c0_i32 = arith.constant 0 : i32
    %c0_i32_0 = arith.constant 0 : i32
    %c0_i32_1 = arith.constant 0 : i32
    return %c0_i32, %c0_i32_0 : i32, i32
  }
  func.func @transform_4(%arg0: i32) -> (i32, i32) {
    %c0_i32 = arith.constant 0 : i32
    %c0_i32_0 = arith.constant 0 : i32
    %c0_i32_1 = arith.constant 0 : i32
    return %c0_i32, %c0_i32_0 : i32, i32
  }
  func.func @transform_5(%arg0: i32) -> (i32, i32) {
    %c0_i32 = arith.constant 0 : i32
    %c0_i32_0 = arith.constant 0 : i32
    %c0_i32_1 = arith.constant 0 : i32
    return %c0_i32, %c0_i32_0 : i32, i32
  }
  func.func @transform_6(%arg0: i32) -> (i32, i32) {
    %c0_i32 = arith.constant 0 : i32
    %c0_i32_0 = arith.constant 0 : i32
    %c0_i32_1 = arith.constant 0 : i32
    return %c0_i32, %c0_i32_0 : i32, i32
  }
  func.func @transform_7(%arg0: i32) -> (i32, i32) {
    %c0_i32 = arith.constant 0 : i32
    %c0_i32_0 = arith.constant 0 : i32
    return %arg0, %c0_i32 : i32, i32
  }
  func.func @transform_8(%arg0: i32) -> (i32, i32) {
    %c0_i32 = arith.constant 0 : i32
    %c0_i32_0 = arith.constant 0 : i32
    return %arg0, %c0_i32 : i32, i32
  }
  func.func @transform_9(%arg0: i32) -> (i32, i32) {
    %c0_i32 = arith.constant 0 : i32
    %c0_i32_0 = arith.constant 0 : i32
    return %arg0, %c0_i32 : i32, i32
  }
}

</mosaic_0001>

<llo_original>
// kernel: tpu_custom_call.1
$region0: #{tpu_custom_call.1}
  #allocation0 [shape = 'u32[]', space=smem, size = 0x4, offset = 0x4, fixed_abs, tag = 'smem constant byte address 0x4 - core index']
  #allocation1 [shape = 'u32[72,128]{1,0:T(1,128)}', space=vmem, size = 0x9000, scoped, tag = 'internal scratch']
  %s0 = inlined_call_operand.hbm [shape: f32[256,256], index: 0, kind: input, shape index: {}]
  %s1 = inlined_call_operand.vmem [shape: f32[256,64], index: 1, kind: input, shape index: {}]
  %s2 = inlined_call_operand.vmem [shape: f32[1,64], index: 2, kind: input, shape index: {}]
  %s3 = inlined_call_operand.vmem [shape: f32[64,256], index: 3, kind: input, shape index: {}]
  %s4 = inlined_call_operand.vmem [shape: f32[1,256], index: 4, kind: input, shape index: {}]
  %s5 = inlined_call_operand.vmem [shape: f32[256,128], index: 5, kind: input, shape index: {}]
  %s6 = inlined_call_operand.vmem [shape: f32[1,128], index: 6, kind: input, shape index: {}]
  %s7 = inlined_call_operand.hbm [shape: f32[256,128], index: 7, kind: output, shape index: {0}]
  %s8 = inlined_call_operand.hbm [shape: f32[256,256], index: 8, kind: output, shape index: {1}]
  %s9 = inlined_call_operand.hbm [shape: f32[256,256], index: 9, kind: output, shape index: {2}]
  %10 = xla_tuple %s7, %s8, %s9
  %s11 = sld [smem:[#allocation0]]
  $region81: #{tpu_custom_call.1} parent=0
    _
  %s13 = ssub.s32 1, %s11
  %s14 = scalar_select 0, %s13, %s11
  $region1: #{tpu_custom_call.1} parent=0
    #allocation2 [shape = 'u8[131072]{0}', space=vmem, size = 0x20000, scoped, tag = 'input window, operand 0']
    #allocation3 [shape = 's32[2]{0}', space=sflag, size = 0x8, scoped, tag = 'scoped memory for tpu_custom_call.1']
    #allocation4 [shape = 's32[2]{0}', space=sflag, size = 0x8, scoped, tag = 'scoped memory for tpu_custom_call.1']
    #allocation5 [shape = 'u8[65536]{0}', space=vmem, size = 0x10000, scoped, tag = 'output window, operand 0']
    #allocation6 [shape = 'u8[131072]{0}', space=vmem, size = 0x20000, scoped, tag = 'output window, operand 1']
    #allocation7 [shape = 's32[2]{0}', space=sflag, size = 0x8, scoped, tag = 'scoped memory for tpu_custom_call.1']
    #allocation8 [shape = 'u8[131072]{0}', space=vmem, size = 0x20000, scoped, tag = 'output window, operand 2']
    %15 = vsyncpa [#allocation3], 0
    %s16 = scalar_lea.sflag [#allocation3], 1
    %17 = vsyncpa %s16, 0
    %18 = vsyncpa [#allocation4], 0
    %s19 = scalar_lea.sflag [#allocation4], 1
    %20 = vsyncpa %s19, 0
    %21 = vsyncpa [#allocation7], 0
    %s22 = scalar_lea.sflag [#allocation7], 1
    %23 = vsyncpa %s22, 0
    loop: start=0, step=1, limit=6
    $region2: #{tpu_custom_call.1} parent=1 // loop_pre_header
      _
    $region3: #{tpu_custom_call.1} parent=1 // loop_header
      %s25 = sphi 0, %s29
      %p26 = scmp.ge.s32.totalorder %s25, 6
      %s35 = sphi 0, %s37
      %s38 = sphi 0, %s35
      %s39 = sphi 0, %s38
      %s55 = sphi 0, %s39
      %s59 = sphi 0, %s59
      %s61 = sphi 0, %s59
      %s62 = sphi 0, %s61
      %s76 = sphi 0, %s62
      %s80 = sphi 0, %s80
      %s82 = sphi 0, %s80
      %s83 = sphi 0, %s82
      %s97 = sphi 0, %s83
      %s101 = sphi 0, %s101
      %s103 = sphi 0, %s101
      %s104 = sphi 0, %s103
      %s118 = sphi 0, %s104
      %s122 = sphi 0, %s122
      %s124 = sphi 0, %s122
      %s125 = sphi 0, %s124
      %s139 = sphi 0, %s125
      %s143 = sphi 0, %s143
      %s145 = sphi 0, %s143
      %s146 = sphi 0, %s145
      %s160 = sphi 0, %s146
      %s164 = sphi 0, %s164
      %s166 = sphi 0, %s164
      %s167 = sphi 0, %s166
      %s181 = sphi 0, %s167
      %s187 = sphi 0, %s189
      %s190 = sphi 0, %s187
      %s191 = sphi 0, %s190
      %s207 = sphi 0, %s191
      %s213 = sphi 0, %s215
      %s216 = sphi 0, %s213
      %s217 = sphi 0, %s216
      %s233 = sphi 0, %s217
      %s239 = sphi 0, %s241
      %s242 = sphi 0, %s239
      %s243 = sphi 0, %s242
      %s259 = sphi 0, %s243
    $region4: #{tpu_custom_call.1} parent=1 // loop_header_branch
      %28 = sbr.rel (%p26) target = $region8
    $region5: #{tpu_custom_call.1} parent=1 // loop_body
      %s30 = ssub.s32 %s25, 1
      %s31 = ssub.s32 %s25, 2
      %s32 = sadd.s32 %s25, 1
      %s33 = ssub.s32 %s25, %s32
      %p34 = scmp.eq.s32.totalorder %s33, 0
      %s36 = sadd.s32 %s35, 1
      %s37 = scalar_select %p34, %s35, %s36
      %p40 = pneg %p34
      %p41 = scmp.eq.s32.totalorder %s25, 3
      %p42 = por %p40, %p41
      %p43 = scmp.ne.s32.totalorder %s35, %s38
      %p44 = scmp.eq.s32.totalorder %s25, 0
      %p45 = por %p43, %p44
      %p46 = scmp.ne.s32.totalorder %s35, %s38
      %p47 = scmp.eq.s32.totalorder %s30, 3
      %p48 = por %p46, %p47
      %p49 = scmp.ne.s32.totalorder %s38, %s39
      %p50 = scmp.eq.s32.totalorder %s30, 0
      %p51 = por %p49, %p50
      %p52 = scmp.ne.s32.totalorder %s38, %s39
      %p53 = scmp.eq.s32.totalorder %s31, 3
      %p54 = por %p52, %p53
      %p56 = scmp.ne.s32.totalorder %s39, %s55
      %p57 = scmp.eq.s32.totalorder %s31, 0
      %p58 = por %p56, %p57
      %s60 = sadd.s32 %s59, 1
      %p63 = scmp.eq.s32.totalorder %s25, 3
      %p64 = scmp.ne.s32.totalorder %s59, %s61
      %p65 = scmp.eq.s32.totalorder %s25, 0
      %p66 = por %p64, %p65
      %p67 = scmp.ne.s32.totalorder %s59, %s61
      %p68 = scmp.eq.s32.totalorder %s30, 3
      %p69 = por %p67, %p68
      %p70 = scmp.ne.s32.totalorder %s61, %s62
      %p71 = scmp.eq.s32.totalorder %s30, 0
      %p72 = por %p70, %p71
      %p73 = scmp.ne.s32.totalorder %s61, %s62
      %p74 = scmp.eq.s32.totalorder %s31, 3
      %p75 = por %p73, %p74
      %p77 = scmp.ne.s32.totalorder %s62, %s76
      %p78 = scmp.eq.s32.totalorder %s31, 0
      %p79 = por %p77, %p78
      %s81 = sadd.s32 %s80, 1
      %p84 = scmp.eq.s32.totalorder %s25, 3
      %p85 = scmp.ne.s32.totalorder %s80, %s82
      %p86 = scmp.eq.s32.totalorder %s25, 0
      %p87 = por %p85, %p86
      %p88 = scmp.ne.s32.totalorder %s80, %s82
      %p89 = scmp.eq.s32.totalorder %s30, 3
      %p90 = por %p88, %p89
      %p91 = scmp.ne.s32.totalorder %s82, %s83
      %p92 = scmp.eq.s32.totalorder %s30, 0
      %p93 = por %p91, %p92
      %p94 = scmp.ne.s32.totalorder %s82, %s83
      %p95 = scmp.eq.s32.totalorder %s31, 3
      %p96 = por %p94, %p95
      %p98 = scmp.ne.s32.totalorder %s83, %s97
      %p99 = scmp.eq.s32.totalorder %s31, 0
      %p100 = por %p98, %p99
      %s102 = sadd.s32 %s101, 1
      %p105 = scmp.eq.s32.totalorder %s25, 3
      %p106 = scmp.ne.s32.totalorder %s101, %s103
      %p107 = scmp.eq.s32.totalorder %s25, 0
      %p108 = por %p106, %p107
      %p109 = scmp.ne.s32.totalorder %s101, %s103
      %p110 = scmp.eq.s32.totalorder %s30, 3
      %p111 = por %p109, %p110
      %p112 = scmp.ne.s32.totalorder %s103, %s104
      %p113 = scmp.eq.s32.totalorder %s30, 0
      %p114 = por %p112, %p113
      %p115 = scmp.ne.s32.totalorder %s103, %s104
      %p116 = scmp.eq.s32.totalorder %s31, 3
      %p117 = por %p115, %p116
      %p119 = scmp.ne.s32.totalorder %s104, %s118
      %p120 = scmp.eq.s32.totalorder %s31, 0
      %p121 = por %p119, %p120
      %s123 = sadd.s32 %s122, 1
      %p126 = scmp.eq.s32.totalorder %s25, 3
      %p127 = scmp.ne.s32.totalorder %s122, %s124
      %p128 = scmp.eq.s32.totalorder %s25, 0
      %p129 = por %p127, %p128
      %p130 = scmp.ne.s32.totalorder %s122, %s124
      %p131 = scmp.eq.s32.totalorder %s30, 3
      %p132 = por %p130, %p131
      %p133 = scmp.ne.s32.totalorder %s124, %s125
      %p134 = scmp.eq.s32.totalorder %s30, 0
      %p135 = por %p133, %p134
      %p136 = scmp.ne.s32.totalorder %s124, %s125
      %p137 = scmp.eq.s32.totalorder %s31, 3
      %p138 = por %p136, %p137
      %p140 = scmp.ne.s32.totalorder %s125, %s139
      %p141 = scmp.eq.s32.totalorder %s31, 0
      %p142 = por %p140, %p141
      %s144 = sadd.s32 %s143, 1
      %p147 = scmp.eq.s32.totalorder %s25, 3
      %p148 = scmp.ne.s32.totalorder %s143, %s145
      %p149 = scmp.eq.s32.totalorder %s25, 0
      %p150 = por %p148, %p149
      %p151 = scmp.ne.s32.totalorder %s143, %s145
      %p152 = scmp.eq.s32.totalorder %s30, 3
      %p153 = por %p151, %p152
      %p154 = scmp.ne.s32.totalorder %s145, %s146
      %p155 = scmp.eq.s32.totalorder %s30, 0
      %p156 = por %p154, %p155
      %p157 = scmp.ne.s32.totalorder %s145, %s146
      %p158 = scmp.eq.s32.totalorder %s31, 3
      %p159 = por %p157, %p158
      %p161 = scmp.ne.s32.totalorder %s146, %s160
      %p162 = scmp.eq.s32.totalorder %s31, 0
      %p163 = por %p161, %p162
      %s165 = sadd.s32 %s164, 1
      %p168 = scmp.eq.s32.totalorder %s25, 3
      %p169 = scmp.ne.s32.totalorder %s164, %s166
      %p170 = scmp.eq.s32.totalorder %s25, 0
      %p171 = por %p169, %p170
      %p172 = scmp.ne.s32.totalorder %s164, %s166
      %p173 = scmp.eq.s32.totalorder %s30, 3
      %p174 = por %p172, %p173
      %p175 = scmp.ne.s32.totalorder %s166, %s167
      %p176 = scmp.eq.s32.totalorder %s30, 0
      %p177 = por %p175, %p176
      %p178 = scmp.ne.s32.totalorder %s166, %s167
      %p179 = scmp.eq.s32.totalorder %s31, 3
      %p180 = por %p178, %p179
      %p182 = scmp.ne.s32.totalorder %s167, %s181
      %p183 = scmp.eq.s32.totalorder %s31, 0
      %p184 = por %p182, %p183
      %s185 = ssub.s32 %s25, %s32
      %p186 = scmp.eq.s32.totalorder %s185, 0
      %s188 = sadd.s32 %s187, 1
      %s189 = scalar_select %p186, %s187, %s188
      %p192 = pneg %p186
      %p193 = scmp.eq.s32.totalorder %s25, 3
      %p194 = por %p192, %p193
      %p195 = scmp.ne.s32.totalorder %s187, %s190
      %p196 = scmp.eq.s32.totalorder %s25, 0
      %p197 = por %p195, %p196
      %p198 = scmp.ne.s32.totalorder %s187, %s190
      %p199 = scmp.eq.s32.totalorder %s30, 3
      %p200 = por %p198, %p199
      %p201 = scmp.ne.s32.totalorder %s190, %s191
      %p202 = scmp.eq.s32.totalorder %s30, 0
      %p203 = por %p201, %p202
      %p204 = scmp.ne.s32.totalorder %s190, %s191
      %p205 = scmp.eq.s32.totalorder %s31, 3
      %p206 = por %p204, %p205
      %p208 = scmp.ne.s32.totalorder %s191, %s207
      %p209 = scmp.eq.s32.totalorder %s31, 0
      %p210 = por %p208, %p209
      %s211 = ssub.s32 %s25, %s32
      %p212 = scmp.eq.s32.totalorder %s211, 0
      %s214 = sadd.s32 %s213, 1
      %s215 = scalar_select %p212, %s213, %s214
      %p218 = pneg %p212
      %p219 = scmp.eq.s32.totalorder %s25, 3
      %p220 = por %p218, %p219
      %p221 = scmp.ne.s32.totalorder %s213, %s216
      %p222 = scmp.eq.s32.totalorder %s25, 0
      %p223 = por %p221, %p222
      %p224 = scmp.ne.s32.totalorder %s213, %s216
      %p225 = scmp.eq.s32.totalorder %s30, 3
      %p226 = por %p224, %p225
      %p227 = scmp.ne.s32.totalorder %s216, %s217
      %p228 = scmp.eq.s32.totalorder %s30, 0
      %p229 = por %p227, %p228
      %p230 = scmp.ne.s32.totalorder %s216, %s217
      %p231 = scmp.eq.s32.totalorder %s31, 3
      %p232 = por %p230, %p231
      %p234 = scmp.ne.s32.totalorder %s217, %s233
      %p235 = scmp.eq.s32.totalorder %s31, 0
      %p236 = por %p234, %p235
      %s237 = ssub.s32 %s25, %s32
      %p238 = scmp.eq.s32.totalorder %s237, 0
      %s240 = sadd.s32 %s239, 1
      %s241 = scalar_select %p238, %s239, %s240
      %p244 = pneg %p238
      %p245 = scmp.eq.s32.totalorder %s25, 3
      %p246 = por %p244, %p245
      %p247 = scmp.ne.s32.totalorder %s239, %s242
      %p248 = scmp.eq.s32.totalorder %s25, 0
      %p249 = por %p247, %p248
      %p250 = scmp.ne.s32.totalorder %s239, %s242
      %p251 = scmp.eq.s32.totalorder %s30, 3
      %p252 = por %p250, %p251
      %p253 = scmp.ne.s32.totalorder %s242, %s243
      %p254 = scmp.eq.s32.totalorder %s30, 0
      %p255 = por %p253, %p254
      %p256 = scmp.ne.s32.totalorder %s242, %s243
      %p257 = scmp.eq.s32.totalorder %s31, 3
      %p258 = por %p256, %p257
      %p260 = scmp.ne.s32.totalorder %s243, %s259
      %p261 = scmp.eq.s32.totalorder %s31, 0
      %p262 = por %p260, %p261
      %p263 = scmp.le.s32.totalorder 1, %s25
      %p264 = scmp.lt.s32.totalorder %s25, 5
      %p265 = pnand %p263, %p264
      %p266 = pneg %p265
      // Predicated region
      $region9: #{tpu_custom_call.1} parent=5 // pred_check
        _
      $region10: #{tpu_custom_call.1} parent=5 // pred_check_branch
        %268 = sbr.rel (%p265) target = $region12
      $region11: #{tpu_custom_call.1} parent=5 // pred_region
        %s269 = ssub.s32 %s25, 1
        // Predicated region
        $region13: #{tpu_custom_call.1} parent=11 // pred_check
          %p270 = pneg %p72
        $region14: #{tpu_custom_call.1} parent=11 // pred_check_branch
          %272 = sbr.rel (%p270) target = $region16
        $region15: #{tpu_custom_call.1} parent=11 // pred_region
          _
        $region16: #{tpu_custom_call.1} parent=11 // pred_fallthru
          _
        // Predicated region
        $region17: #{tpu_custom_call.1} parent=11 // pred_check
          %p273 = pneg %p93
        $region18: #{tpu_custom_call.1} parent=11 // pred_check_branch
          %275 = sbr.rel (%p273) target = $region20
        $region19: #{tpu_custom_call.1} parent=11 // pred_region
          _
        $region20: #{tpu_custom_call.1} parent=11 // pred_fallthru
          _
        // Predicated region
        $region21: #{tpu_custom_call.1} parent=11 // pred_check
          %p276 = pneg %p114
        $region22: #{tpu_custom_call.1} parent=11 // pred_check_branch
          %278 = sbr.rel (%p276) target = $region24
        $region23: #{tpu_custom_call.1} parent=11 // pred_region
          _
        $region24: #{tpu_custom_call.1} parent=11 // pred_fallthru
          _
        // Predicated region
        $region25: #{tpu_custom_call.1} parent=11 // pred_check
          %p279 = pneg %p135
        $region26: #{tpu_custom_call.1} parent=11 // pred_check_branch
          %281 = sbr.rel (%p279) target = $region28
        $region27: #{tpu_custom_call.1} parent=11 // pred_region
          _
        $region28: #{tpu_custom_call.1} parent=11 // pred_fallthru
          _
        // Predicated region
        $region29: #{tpu_custom_call.1} parent=11 // pred_check
          %p282 = pneg %p156
        $region30: #{tpu_custom_call.1} parent=11 // pred_check_branch
          %284 = sbr.rel (%p282) target = $region32
        $region31: #{tpu_custom_call.1} parent=11 // pred_region
          _
        $region32: #{tpu_custom_call.1} parent=11 // pred_fallthru
          _
        // Predicated region
        $region33: #{tpu_custom_call.1} parent=11 // pred_check
          %p285 = pneg %p177
        $region34: #{tpu_custom_call.1} parent=11 // pred_check_branch
          %287 = sbr.rel (%p285) target = $region36
        $region35: #{tpu_custom_call.1} parent=11 // pred_region
          _
        $region36: #{tpu_custom_call.1} parent=11 // pred_fallthru
          _
      $region12: #{tpu_custom_call.1} parent=5 // pred_fallthru
        _
      %p288 = scmp.lt.s32.totalorder %s25, 4
      // Predicated region
      $region37: #{tpu_custom_call.1} parent=5 // pred_check
        %p289 = pneg %p288
      $region38: #{tpu_custom_call.1} parent=5 // pred_check_branch
        %291 = sbr.rel (%p289) target = $region40
      $region39: #{tpu_custom_call.1} parent=5 // pred_region
        // Predicated region
        $region41: #{tpu_custom_call.1} parent=39 // pred_check
          %p292 = pneg %p45
        $region42: #{tpu_custom_call.1} parent=39 // pred_check_branch
          %294 = sbr.rel (%p292) target = $region44
        $region43: #{tpu_custom_call.1} parent=39 // pred_region
          %s295 = sand.u32 %s35, 1
          %s296 = scalar_lea.sflag [#allocation3], %s295
          %s297 = sand.u32 %s35, 1
          %s298 = smul.addr %s297, 128
          %s299 = scalar_lea.vmem [#allocation2], %s298
          %s300 = smul.u32 8, %s25
          %302 = vsyncadd %s296, 0
          %s303 = smul.addr %s300, 2
          %s304 = smul.addr %s303, 8
          %s305 = scalar_lea.hbm %s0, %s304
          %s306 = sshll.u32 %s305, 4
          %s307 = int_to_ptr.hbm [resolvable:$true] %s306
          %s308 = sshll.u32 %s299, 4
          %s309 = int_to_ptr.vmem [resolvable:$true] %s308
          %314 = dma.hbm_to_vmem [thread:$0]  %s307, 2048, %s309, %s296, 256, 256, 16
        $region44: #{tpu_custom_call.1} parent=39 // pred_fallthru
          _
      $region40: #{tpu_custom_call.1} parent=5 // pred_fallthru
        _
      %p315 = scmp.le.s32.totalorder 1, %s25
      %p316 = scmp.lt.s32.totalorder %s25, 5
      %p317 = pnand %p315, %p316
      %p318 = pneg %p317
      // Predicated region
      $region45: #{tpu_custom_call.1} parent=5 // pred_check
        _
      $region46: #{tpu_custom_call.1} parent=5 // pred_check_branch
        %320 = sbr.rel (%p317) target = $region48
      $region47: #{tpu_custom_call.1} parent=5 // pred_region
        %s321 = ssub.s32 %s25, 1
        %s322 = sand.u32 %s38, 1
        %s323 = scalar_lea.sflag [#allocation3], %s322
        %s324 = sand.u32 %s38, 1
        %s325 = smul.addr %s324, 128
        %s326 = scalar_lea.vmem [#allocation2], %s325
        // Predicated region
        $region49: #{tpu_custom_call.1} parent=47 // pred_check
          %p327 = pneg %p51
        $region50: #{tpu_custom_call.1} parent=47 // pred_check_branch
          %329 = sbr.rel (%p327) target = $region52
        $region51: #{tpu_custom_call.1} parent=47 // pred_region
          %331 = dma.done %s323, 2048
        $region52: #{tpu_custom_call.1} parent=47 // pred_fallthru
          _
        %s332 = sand.u32 %s38, 1
        %s333 = scalar_lea.sflag [#allocation3], %s332
        %s334 = sand.u32 %s38, 1
        %s335 = smul.addr %s334, 128
        %s336 = scalar_lea.vmem [#allocation2], %s335
        %p337 = pneg %p51
        %p338 = pneg %p48
        %p339 = pneg %p72
        %p340 = pneg %p69
        %p341 = pneg %p93
        %p342 = pneg %p90
        %p343 = pneg %p114
        %p344 = pneg %p111
        %p345 = pneg %p135
        %p346 = pneg %p132
        %p347 = pneg %p156
        %p348 = pneg %p153
        %p349 = pneg %p177
        %p350 = pneg %p174
        %p351 = pneg %p203
        %p352 = pneg %p200
        %s353 = sand.u32 %s190, 1
        %s354 = scalar_lea.sflag [#allocation4], %s353
        %s355 = sand.u32 %s190, 1
        %s356 = smul.addr %s355, 64
        %s357 = scalar_lea.vmem [#allocation5], %s356
        %p358 = pneg %p229
        %p359 = pneg %p226
        %s360 = sand.u32 %s30, 1
        %s361 = scalar_lea.sflag [#allocation7], %s360
        %s362 = sand.u32 %s216, 1
        %s363 = smul.addr %s362, 128
        %s364 = scalar_lea.vmem [#allocation6], %s363
        %p365 = pneg %p255
        %p366 = pneg %p252
        %s367 = sand.u32 %s30, 1
        %s368 = scalar_lea.sflag [#allocation7], %s367
        %s369 = sand.u32 %s242, 1
        %s370 = smul.addr %s369, 128
        %s371 = scalar_lea.vmem [#allocation8], %s370
        %s372 = smul.u32 8, %s30
        %s373 = smul.u32 8, %s30
        %s374 = smul.u32 8, %s30
        %s375 = smul.u32 8, %s30
        %v376 = vld [vmem:[%s326] sm:$0xff]
        %v377 = vld [vmem:[%s326 + $0x8] sm:$0xff]
        %v378 = vld [vmem:[%s326 + $0x10] sm:$0xff]
        %v379 = vld [vmem:[%s326 + $0x18] sm:$0xff]
        %v380 = vld [vmem:[%s326 + $0x20] sm:$0xff]
        %v381 = vld [vmem:[%s326 + $0x28] sm:$0xff]
        %v382 = vld [vmem:[%s326 + $0x30] sm:$0xff]
        %v383 = vld [vmem:[%s326 + $0x38] sm:$0xff]
        %v384 = vld [vmem:[%s326 + $0x40] sm:$0xff]
        %v385 = vld [vmem:[%s326 + $0x48] sm:$0xff]
        %v386 = vld [vmem:[%s326 + $0x50] sm:$0xff]
        %v387 = vld [vmem:[%s326 + $0x58] sm:$0xff]
        %v388 = vld [vmem:[%s326 + $0x60] sm:$0xff]
        %v389 = vld [vmem:[%s326 + $0x68] sm:$0xff]
        %v390 = vld [vmem:[%s326 + $0x70] sm:$0xff]
        %v391 = vld [vmem:[%s326 + $0x78] sm:$0xff]
        %v392 = vld [vmem:[%s1] sm:$0xff]
        %v393 = vld [vmem:[%s1 + $0x8] sm:$0xff]
        %v394 = vld [vmem:[%s1 + $0x10] sm:$0xff]
        %v395 = vld [vmem:[%s1 + $0x18] sm:$0xff]
        %v396 = vld [vmem:[%s1 + $0x20] sm:$0xff]
        %v397 = vld [vmem:[%s1 + $0x28] sm:$0xff]
        %v398 = vld [vmem:[%s1 + $0x30] sm:$0xff]
        %v399 = vld [vmem:[%s1 + $0x38] sm:$0xff]
        %v400 = vld [vmem:[%s1 + $0x40] sm:$0xff]
        %v401 = vld [vmem:[%s1 + $0x48] sm:$0xff]
        %v402 = vld [vmem:[%s1 + $0x50] sm:$0xff]
        %v403 = vld [vmem:[%s1 + $0x58] sm:$0xff]
        %v404 = vld [vmem:[%s1 + $0x60] sm:$0xff]
        %v405 = vld [vmem:[%s1 + $0x68] sm:$0xff]
        %v406 = vld [vmem:[%s1 + $0x70] sm:$0xff]
        %v407 = vld [vmem:[%s1 + $0x78] sm:$0xff]
        %v408 = vld [vmem:[%s1 + $0x80] sm:$0xff]
        %v409 = vld [vmem:[%s1 + $0x88] sm:$0xff]
        %v410 = vld [vmem:[%s1 + $0x90] sm:$0xff]
        %v411 = vld [vmem:[%s1 + $0x98] sm:$0xff]
        %v412 = vld [vmem:[%s1 + $0xa0] sm:$0xff]
        %v413 = vld [vmem:[%s1 + $0xa8] sm:$0xff]
        %v414 = vld [vmem:[%s1 + $0xb0] sm:$0xff]
        %v415 = vld [vmem:[%s1 + $0xb8] sm:$0xff]
        %v416 = vld [vmem:[%s1 + $0xc0] sm:$0xff]
        %v417 = vld [vmem:[%s1 + $0xc8] sm:$0xff]
        %v418 = vld [vmem:[%s1 + $0xd0] sm:$0xff]
        %v419 = vld [vmem:[%s1 + $0xd8] sm:$0xff]
        %v420 = vld [vmem:[%s1 + $0xe0] sm:$0xff]
        %v421 = vld [vmem:[%s1 + $0xe8] sm:$0xff]
        %v422 = vld [vmem:[%s1 + $0xf0] sm:$0xff]
        %v423 = vld [vmem:[%s1 + $0xf8] sm:$0xff]
        %v424 = vld [vmem:[%s2] sm:$0x1]
        %v426 = vperm.slane %v424, 0
        %428 = vmatpush.msra.mxu0 %v407
        %429 = vmatpush.msra.mxu0 %v406
        %430 = vmatpush.msra.mxu0 %v405
        %431 = vmatpush.msra.mxu0 %v404
        %432 = vmatpush.msra.mxu0 %v403
        %433 = vmatpush.msra.mxu0 %v402
        %434 = vmatpush.msra.mxu0 %v401
        %435 = vmatpush.msra.mxu0 %v400
        %436 = vmatpush.msra.mxu0 %v399
        %437 = vmatpush.msra.mxu0 %v398
        %438 = vmatpush.msra.mxu0 %v397
        %439 = vmatpush.msra.mxu0 %v396
        %440 = vmatpush.msra.mxu0 %v395
        %441 = vmatpush.msra.mxu0 %v394
        %442 = vmatpush.msra.mxu0 %v393
        %443 = vmatpush.msra.mxu0 %v392
        %444 = vmatmul.f32.gmra.mxu0 %v376
        %v445 = vpop.f32.mrf.mxu0
        %v446 = vadd.f32 %v426, %v445
        %447 = vmatmul.f32.gmra.mxu0 %v378
        %v448 = vpop.f32.mrf.mxu0
        %v449 = vadd.f32 %v426, %v448
        %450 = vmatmul.f32.gmra.mxu0 %v380
        %v451 = vpop.f32.mrf.mxu0
        %v452 = vadd.f32 %v426, %v451
        %453 = vmatmul.f32.gmra.mxu0 %v382
        %v454 = vpop.f32.mrf.mxu0
        %v455 = vadd.f32 %v426, %v454
        %456 = vmatmul.f32.gmra.mxu0 %v384
        %v457 = vpop.f32.mrf.mxu0
        %v458 = vadd.f32 %v426, %v457
        %459 = vmatmul.f32.gmra.mxu0 %v386
        %v460 = vpop.f32.mrf.mxu0
        %v461 = vadd.f32 %v426, %v460
        %462 = vmatmul.f32.gmra.mxu0 %v388
        %v463 = vpop.f32.mrf.mxu0
        %v464 = vadd.f32 %v426, %v463
        %465 = vmatmul.f32.gmra.mxu0 %v390
        %v466 = vpop.f32.mrf.mxu0
        %v467 = vadd.f32 %v426, %v466
        %468 = vdwg.mxu0
        %469 = vmatpush.msra.mxu0 %v423
        %470 = vmatpush.msra.mxu0 %v422
        %471 = vmatpush.msra.mxu0 %v421
        %472 = vmatpush.msra.mxu0 %v420
        %473 = vmatpush.msra.mxu0 %v419
        %474 = vmatpush.msra.mxu0 %v418
        %475 = vmatpush.msra.mxu0 %v417
        %476 = vmatpush.msra.mxu0 %v416
        %477 = vmatpush.msra.mxu0 %v415
        %478 = vmatpush.msra.mxu0 %v414
        %479 = vmatpush.msra.mxu0 %v413
        %480 = vmatpush.msra.mxu0 %v412
        %481 = vmatpush.msra.mxu0 %v411
        %482 = vmatpush.msra.mxu0 %v410
        %483 = vmatpush.msra.mxu0 %v409
        %484 = vmatpush.msra.mxu0 %v408
        %485 = vmatmul.f32.gmra.mxu0 %v377
        %v486 = vpop.f32.mrf.mxu0
        %v487 = vadd.f32 %v446, %v486
        %488 = vmatmul.f32.gmra.mxu0 %v379
        %v489 = vpop.f32.mrf.mxu0
        %v490 = vadd.f32 %v449, %v489
        %491 = vmatmul.f32.gmra.mxu0 %v381
        %v492 = vpop.f32.mrf.mxu0
        %v493 = vadd.f32 %v452, %v492
        %494 = vmatmul.f32.gmra.mxu0 %v383
        %v495 = vpop.f32.mrf.mxu0
        %v496 = vadd.f32 %v455, %v495
        %497 = vmatmul.f32.gmra.mxu0 %v385
        %v498 = vpop.f32.mrf.mxu0
        %v499 = vadd.f32 %v458, %v498
        %500 = vmatmul.f32.gmra.mxu0 %v387
        %v501 = vpop.f32.mrf.mxu0
        %v502 = vadd.f32 %v461, %v501
        %503 = vmatmul.f32.gmra.mxu0 %v389
        %v504 = vpop.f32.mrf.mxu0
        %v505 = vadd.f32 %v464, %v504
        %506 = vmatmul.f32.gmra.mxu0 %v391
        %v507 = vpop.f32.mrf.mxu0
        %v508 = vadd.f32 %v467, %v507
        %509 = vdwg.mxu0
        %v510 = vmax.f32 %v487, 0.0
        %v511 = vmax.f32 %v490, 0.0
        %v512 = vmax.f32 %v493, 0.0
        %v513 = vmax.f32 %v496, 0.0
        %v514 = vmax.f32 %v499, 0.0
        %v515 = vmax.f32 %v502, 0.0
        %v516 = vmax.f32 %v505, 0.0
        %v517 = vmax.f32 %v508, 0.0
        %v518 = vld [vmem:[%s3] sm:$0xff]
        %v519 = vld [vmem:[%s3 + $0x8] sm:$0xff]
        %v520 = vld [vmem:[%s3 + $0x10] sm:$0xff]
        %v521 = vld [vmem:[%s3 + $0x18] sm:$0xff]
        %v522 = vld [vmem:[%s3 + $0x20] sm:$0xff]
        %v523 = vld [vmem:[%s3 + $0x28] sm:$0xff]
        %v524 = vld [vmem:[%s3 + $0x30] sm:$0xff]
        %v525 = vld [vmem:[%s3 + $0x38] sm:$0xff]
        %v526 = vld [vmem:[%s3 + $0x40] sm:$0xff]
        %v527 = vld [vmem:[%s3 + $0x48] sm:$0xff]
        %v528 = vld [vmem:[%s3 + $0x50] sm:$0xff]
        %v529 = vld [vmem:[%s3 + $0x58] sm:$0xff]
        %v530 = vld [vmem:[%s3 + $0x60] sm:$0xff]
        %v531 = vld [vmem:[%s3 + $0x68] sm:$0xff]
        %v532 = vld [vmem:[%s3 + $0x70] sm:$0xff]
        %v533 = vld [vmem:[%s3 + $0x78] sm:$0xff]
        %v534 = vld [vmem:[%s4] sm:$0x3]
        %v536 = vperm.slane %v534, 0
        %v537 = vperm.slane %v534, 1
        %vm540 = vcmask 523264
        %v542 = vsel %vm540, %v510, 0
        %v545 = vsel %vm540, %v511, 0
        %v548 = vsel %vm540, %v512, 0
        %v551 = vsel %vm540, %v513, 0
        %v554 = vsel %vm540, %v514, 0
        %v557 = vsel %vm540, %v515, 0
        %v560 = vsel %vm540, %v516, 0
        %v563 = vsel %vm540, %v517, 0
        %565 = vmatpush.msra.mxu0 0.0
        %566 = vmatpush.msra.mxu0 0.0
        %567 = vmatpush.msra.mxu0 0.0
        %568 = vmatpush.msra.mxu0 0.0
        %569 = vmatpush.msra.mxu0 0.0
        %570 = vmatpush.msra.mxu0 0.0
        %571 = vmatpush.msra.mxu0 0.0
        %572 = vmatpush.msra.mxu0 0.0
        %573 = vmatpush.msra.mxu0 %v532
        %574 = vmatpush.msra.mxu0 %v530
        %575 = vmatpush.msra.mxu0 %v528
        %576 = vmatpush.msra.mxu0 %v526
        %577 = vmatpush.msra.mxu0 %v524
        %578 = vmatpush.msra.mxu0 %v522
        %579 = vmatpush.msra.mxu0 %v520
        %580 = vmatpush.msra.mxu0 %v518
        %581 = vmatmul.f32.gmra.mxu0 %v542
        %v582 = vpop.f32.mrf.mxu0
        %v583 = vadd.f32 %v536, %v582
        %584 = vmatmul.f32.gmra.mxu0 %v545
        %v585 = vpop.f32.mrf.mxu0
        %v586 = vadd.f32 %v536, %v585
        %587 = vmatmul.f32.gmra.mxu0 %v548
        %v588 = vpop.f32.mrf.mxu0
        %v589 = vadd.f32 %v536, %v588
        %590 = vmatmul.f32.gmra.mxu0 %v551
        %v591 = vpop.f32.mrf.mxu0
        %v592 = vadd.f32 %v536, %v591
        %593 = vmatmul.f32.gmra.mxu0 %v554
        %v594 = vpop.f32.mrf.mxu0
        %v595 = vadd.f32 %v536, %v594
        %596 = vmatmul.f32.gmra.mxu0 %v557
        %v597 = vpop.f32.mrf.mxu0
        %v598 = vadd.f32 %v536, %v597
        %599 = vmatmul.f32.gmra.mxu0 %v560
        %v600 = vpop.f32.mrf.mxu0
        %v601 = vadd.f32 %v536, %v600
        %602 = vmatmul.f32.gmra.mxu0 %v563
        %v603 = vpop.f32.mrf.mxu0
        %v604 = vadd.f32 %v536, %v603
        %605 = vdwg.mxu0
        %606 = vmatpush.msra.mxu0 0.0
        %607 = vmatpush.msra.mxu0 0.0
        %608 = vmatpush.msra.mxu0 0.0
        %609 = vmatpush.msra.mxu0 0.0
        %610 = vmatpush.msra.mxu0 0.0
        %611 = vmatpush.msra.mxu0 0.0
        %612 = vmatpush.msra.mxu0 0.0
        %613 = vmatpush.msra.mxu0 0.0
        %614 = vmatpush.msra.mxu0 %v533
        %615 = vmatpush.msra.mxu0 %v531
        %616 = vmatpush.msra.mxu0 %v529
        %617 = vmatpush.msra.mxu0 %v527
        %618 = vmatpush.msra.mxu0 %v525
        %619 = vmatpush.msra.mxu0 %v523
        %620 = vmatpush.msra.mxu0 %v521
        %621 = vmatpush.msra.mxu0 %v519
        %622 = vmatmul.f32.gmra.mxu0 %v542
        %v623 = vpop.f32.mrf.mxu0
        %v624 = vadd.f32 %v537, %v623
        %625 = vmatmul.f32.gmra.mxu0 %v545
        %v626 = vpop.f32.mrf.mxu0
        %v627 = vadd.f32 %v537, %v626
        %628 = vmatmul.f32.gmra.mxu0 %v548
        %v629 = vpop.f32.mrf.mxu0
        %v630 = vadd.f32 %v537, %v629
        %631 = vmatmul.f32.gmra.mxu0 %v551
        %v632 = vpop.f32.mrf.mxu0
        %v633 = vadd.f32 %v537, %v632
        %634 = vmatmul.f32.gmra.mxu0 %v554
        %v635 = vpop.f32.mrf.mxu0
        %v636 = vadd.f32 %v537, %v635
        %637 = vmatmul.f32.gmra.mxu0 %v557
        %v638 = vpop.f32.mrf.mxu0
        %v639 = vadd.f32 %v537, %v638
        %640 = vmatmul.f32.gmra.mxu0 %v560
        %v641 = vpop.f32.mrf.mxu0
        %v642 = vadd.f32 %v537, %v641
        %643 = vmatmul.f32.gmra.mxu0 %v563
        %v644 = vpop.f32.mrf.mxu0
        %v645 = vadd.f32 %v537, %v644
        %646 = vdwg.mxu0
        %v647 = vadd.f32 %v376, %v583
        %v648 = vadd.f32 %v377, %v624
        %v649 = vadd.f32 %v378, %v586
        %v650 = vadd.f32 %v379, %v627
        %v651 = vadd.f32 %v380, %v589
        %v652 = vadd.f32 %v381, %v630
        %v653 = vadd.f32 %v382, %v592
        %v654 = vadd.f32 %v383, %v633
        %v655 = vadd.f32 %v384, %v595
        %v656 = vadd.f32 %v385, %v636
        %v657 = vadd.f32 %v386, %v598
        %v658 = vadd.f32 %v387, %v639
        %v659 = vadd.f32 %v388, %v601
        %v660 = vadd.f32 %v389, %v642
        %v661 = vadd.f32 %v390, %v604
        %v662 = vadd.f32 %v391, %v645
        %v663 = vld [vmem:[%s5] sm:$0xff]
        %v664 = vld [vmem:[%s5 + $0x8] sm:$0xff]
        %v665 = vld [vmem:[%s5 + $0x10] sm:$0xff]
        %v666 = vld [vmem:[%s5 + $0x18] sm:$0xff]
        %v667 = vld [vmem:[%s5 + $0x20] sm:$0xff]
        %v668 = vld [vmem:[%s5 + $0x28] sm:$0xff]
        %v669 = vld [vmem:[%s5 + $0x30] sm:$0xff]
        %v670 = vld [vmem:[%s5 + $0x38] sm:$0xff]
        %v671 = vld [vmem:[%s5 + $0x40] sm:$0xff]
        %v672 = vld [vmem:[%s5 + $0x48] sm:$0xff]
        %v673 = vld [vmem:[%s5 + $0x50] sm:$0xff]
        %v674 = vld [vmem:[%s5 + $0x58] sm:$0xff]
        %v675 = vld [vmem:[%s5 + $0x60] sm:$0xff]
        %v676 = vld [vmem:[%s5 + $0x68] sm:$0xff]
        %v677 = vld [vmem:[%s5 + $0x70] sm:$0xff]
        %v678 = vld [vmem:[%s5 + $0x78] sm:$0xff]
        %v679 = vld [vmem:[%s5 + $0x80] sm:$0xff]
        %v680 = vld [vmem:[%s5 + $0x88] sm:$0xff]
        %v681 = vld [vmem:[%s5 + $0x90] sm:$0xff]
        %v682 = vld [vmem:[%s5 + $0x98] sm:$0xff]
        %v683 = vld [vmem:[%s5 + $0xa0] sm:$0xff]
        %v684 = vld [vmem:[%s5 + $0xa8] sm:$0xff]
        %v685 = vld [vmem:[%s5 + $0xb0] sm:$0xff]
        %v686 = vld [vmem:[%s5 + $0xb8] sm:$0xff]
        %v687 = vld [vmem:[%s5 + $0xc0] sm:$0xff]
        %v688 = vld [vmem:[%s5 + $0xc8] sm:$0xff]
        %v689 = vld [vmem:[%s5 + $0xd0] sm:$0xff]
        %v690 = vld [vmem:[%s5 + $0xd8] sm:$0xff]
        %v691 = vld [vmem:[%s5 + $0xe0] sm:$0xff]
        %v692 = vld [vmem:[%s5 + $0xe8] sm:$0xff]
        %v693 = vld [vmem:[%s5 + $0xf0] sm:$0xff]
        %v694 = vld [vmem:[%s5 + $0xf8] sm:$0xff]
        %v695 = vld [vmem:[%s6] sm:$0x1]
        %v697 = vperm.slane %v695, 0
        %699 = vmatpush.msra.mxu0 %v678
        %700 = vmatpush.msra.mxu0 %v677
        %701 = vmatpush.msra.mxu0 %v676
        %702 = vmatpush.msra.mxu0 %v675
        %703 = vmatpush.msra.mxu0 %v674
        %704 = vmatpush.msra.mxu0 %v673
        %705 = vmatpush.msra.mxu0 %v672
        %706 = vmatpush.msra.mxu0 %v671
        %707 = vmatpush.msra.mxu0 %v670
        %708 = vmatpush.msra.mxu0 %v669
        %709 = vmatpush.msra.mxu0 %v668
        %710 = vmatpush.msra.mxu0 %v667
        %711 = vmatpush.msra.mxu0 %v666
        %712 = vmatpush.msra.mxu0 %v665
        %713 = vmatpush.msra.mxu0 %v664
        %714 = vmatpush.msra.mxu0 %v663
        %715 = vmatmul.f32.gmra.mxu0 %v647
        %v716 = vpop.f32.mrf.mxu0
        %v717 = vadd.f32 %v697, %v716
        %718 = vmatmul.f32.gmra.mxu0 %v649
        %v719 = vpop.f32.mrf.mxu0
        %v720 = vadd.f32 %v697, %v719
        %721 = vmatmul.f32.gmra.mxu0 %v651
        %v722 = vpop.f32.mrf.mxu0
        %v723 = vadd.f32 %v697, %v722
        %724 = vmatmul.f32.gmra.mxu0 %v653
        %v725 = vpop.f32.mrf.mxu0
        %v726 = vadd.f32 %v697, %v725
        %727 = vmatmul.f32.gmra.mxu0 %v655
        %v728 = vpop.f32.mrf.mxu0
        %v729 = vadd.f32 %v697, %v728
        %730 = vmatmul.f32.gmra.mxu0 %v657
        %v731 = vpop.f32.mrf.mxu0
        %v732 = vadd.f32 %v697, %v731
        %733 = vmatmul.f32.gmra.mxu0 %v659
        %v734 = vpop.f32.mrf.mxu0
        %v735 = vadd.f32 %v697, %v734
        %736 = vmatmul.f32.gmra.mxu0 %v661
        %v737 = vpop.f32.mrf.mxu0
        %v738 = vadd.f32 %v697, %v737
        %739 = vdwg.mxu0
        %740 = vmatpush.msra.mxu0 %v694
        %741 = vmatpush.msra.mxu0 %v693
        %742 = vmatpush.msra.mxu0 %v692
        %743 = vmatpush.msra.mxu0 %v691
        %744 = vmatpush.msra.mxu0 %v690
        %745 = vmatpush.msra.mxu0 %v689
        %746 = vmatpush.msra.mxu0 %v688
        %747 = vmatpush.msra.mxu0 %v687
        %748 = vmatpush.msra.mxu0 %v686
        %749 = vmatpush.msra.mxu0 %v685
        %750 = vmatpush.msra.mxu0 %v684
        %751 = vmatpush.msra.mxu0 %v683
        %752 = vmatpush.msra.mxu0 %v682
        %753 = vmatpush.msra.mxu0 %v681
        %754 = vmatpush.msra.mxu0 %v680
        %755 = vmatpush.msra.mxu0 %v679
        %756 = vmatmul.f32.gmra.mxu0 %v648
        %v757 = vpop.f32.mrf.mxu0
        %v758 = vadd.f32 %v717, %v757
        %759 = vmatmul.f32.gmra.mxu0 %v650
        %v760 = vpop.f32.mrf.mxu0
        %v761 = vadd.f32 %v720, %v760
        %762 = vmatmul.f32.gmra.mxu0 %v652
        %v763 = vpop.f32.mrf.mxu0
        %v764 = vadd.f32 %v723, %v763
        %765 = vmatmul.f32.gmra.mxu0 %v654
        %v766 = vpop.f32.mrf.mxu0
        %v767 = vadd.f32 %v726, %v766
        %768 = vmatmul.f32.gmra.mxu0 %v656
        %v769 = vpop.f32.mrf.mxu0
        %v770 = vadd.f32 %v729, %v769
        %771 = vmatmul.f32.gmra.mxu0 %v658
        %v772 = vpop.f32.mrf.mxu0
        %v773 = vadd.f32 %v732, %v772
        %774 = vmatmul.f32.gmra.mxu0 %v660
        %v775 = vpop.f32.mrf.mxu0
        %v776 = vadd.f32 %v735, %v775
        %777 = vmatmul.f32.gmra.mxu0 %v662
        %v778 = vpop.f32.mrf.mxu0
        %v779 = vadd.f32 %v738, %v778
        %780 = vdwg.mxu0
        %781 = vst [vmem:[%s357] sm:$0xff] %v758
        %782 = vst [vmem:[%s357 + $0x8] sm:$0xff] %v761
        %783 = vst [vmem:[%s357 + $0x10] sm:$0xff] %v764
        %784 = vst [vmem:[%s357 + $0x18] sm:$0xff] %v767
        %785 = vst [vmem:[%s357 + $0x20] sm:$0xff] %v770
        %786 = vst [vmem:[%s357 + $0x28] sm:$0xff] %v773
        %787 = vst [vmem:[%s357 + $0x30] sm:$0xff] %v776
        %788 = vst [vmem:[%s357 + $0x38] sm:$0xff] %v779
        %789 = vst [vmem:[%s364] sm:$0xff] %v647
        %790 = vst [vmem:[%s364 + $0x8] sm:$0xff] %v648
        %791 = vst [vmem:[%s364 + $0x10] sm:$0xff] %v649
        %792 = vst [vmem:[%s364 + $0x18] sm:$0xff] %v650
        %793 = vst [vmem:[%s364 + $0x20] sm:$0xff] %v651
        %794 = vst [vmem:[%s364 + $0x28] sm:$0xff] %v652
        %795 = vst [vmem:[%s364 + $0x30] sm:$0xff] %v653
        %796 = vst [vmem:[%s364 + $0x38] sm:$0xff] %v654
        %797 = vst [vmem:[%s364 + $0x40] sm:$0xff] %v655
        %798 = vst [vmem:[%s364 + $0x48] sm:$0xff] %v656
        %799 = vst [vmem:[%s364 + $0x50] sm:$0xff] %v657
        %800 = vst [vmem:[%s364 + $0x58] sm:$0xff] %v658
        %801 = vst [vmem:[%s364 + $0x60] sm:$0xff] %v659
        %802 = vst [vmem:[%s364 + $0x68] sm:$0xff] %v660
        %803 = vst [vmem:[%s364 + $0x70] sm:$0xff] %v661
        %804 = vst [vmem:[%s364 + $0x78] sm:$0xff] %v662
        %805 = vst [vmem:[%s371] sm:$0xff] %v583
        %806 = vst [vmem:[%s371 + $0x8] sm:$0xff] %v624
        %807 = vst [vmem:[%s371 + $0x10] sm:$0xff] %v586
        %808 = vst [vmem:[%s371 + $0x18] sm:$0xff] %v627
        %809 = vst [vmem:[%s371 + $0x20] sm:$0xff] %v589
        %810 = vst [vmem:[%s371 + $0x28] sm:$0xff] %v630
        %811 = vst [vmem:[%s371 + $0x30] sm:$0xff] %v592
        %812 = vst [vmem:[%s371 + $0x38] sm:$0xff] %v633
        %813 = vst [vmem:[%s371 + $0x40] sm:$0xff] %v595
        %814 = vst [vmem:[%s371 + $0x48] sm:$0xff] %v636
        %815 = vst [vmem:[%s371 + $0x50] sm:$0xff] %v598
        %816 = vst [vmem:[%s371 + $0x58] sm:$0xff] %v639
        %817 = vst [vmem:[%s371 + $0x60] sm:$0xff] %v601
        %818 = vst [vmem:[%s371 + $0x68] sm:$0xff] %v642
        %819 = vst [vmem:[%s371 + $0x70] sm:$0xff] %v604
        %820 = vst [vmem:[%s371 + $0x78] sm:$0xff] %v645
        %s821 = sand.u32 %s190, 1
        %s822 = scalar_lea.sflag [#allocation4], %s821
        %s823 = sand.u32 %s190, 1
        %s824 = smul.addr %s823, 64
        %s825 = scalar_lea.vmem [#allocation5], %s824
        %s826 = sand.u32 %s30, 1
        %s827 = scalar_lea.sflag [#allocation7], %s826
        %s828 = sand.u32 %s216, 1
        %s829 = smul.addr %s828, 128
        %s830 = scalar_lea.vmem [#allocation6], %s829
        %s831 = sand.u32 %s30, 1
        %s832 = scalar_lea.sflag [#allocation7], %s831
        %s833 = sand.u32 %s242, 1
        %s834 = smul.addr %s833, 128
        %s835 = scalar_lea.vmem [#allocation8], %s834
        // Predicated region
        $region53: #{tpu_custom_call.1} parent=47 // pred_check
          %p836 = pneg %p200
        $region54: #{tpu_custom_call.1} parent=47 // pred_check_branch
          %838 = sbr.rel (%p836) target = $region56
        $region55: #{tpu_custom_call.1} parent=47 // pred_region
          %s839 = smul.u32 8, %s30
          %841 = vsyncadd %s822, 0
          %s842 = smul.addr %s839, 8
          %s843 = scalar_lea.hbm %s7, %s842
          %s844 = sshll.u32 %s825, 4
          %s845 = int_to_ptr.vmem [resolvable:$true] %s844
          %s846 = sshll.u32 %s843, 4
          %s847 = int_to_ptr.hbm [resolvable:$true] %s846
          %852 = dma.vmem_to_hbm [thread:$0]  %s845, 1024, %s847, %s822, 128, 128, 8
        $region56: #{tpu_custom_call.1} parent=47 // pred_fallthru
          _
        // Predicated region
        $region57: #{tpu_custom_call.1} parent=47 // pred_check
          %p853 = pneg %p226
        $region58: #{tpu_custom_call.1} parent=47 // pred_check_branch
          %855 = sbr.rel (%p853) target = $region60
        $region59: #{tpu_custom_call.1} parent=47 // pred_region
          %s856 = smul.u32 8, %s30
          %858 = vsyncadd %s827, 0
          %s859 = smul.addr %s856, 2
          %s860 = smul.addr %s859, 8
          %s861 = scalar_lea.hbm %s8, %s860
          %s862 = sshll.u32 %s830, 4
          %s863 = int_to_ptr.vmem [resolvable:$true] %s862
          %s864 = sshll.u32 %s861, 4
          %s865 = int_to_ptr.hbm [resolvable:$true] %s864
          %870 = dma.vmem_to_hbm [thread:$0]  %s863, 2048, %s865, %s827, 256, 256, 16
        $region60: #{tpu_custom_call.1} parent=47 // pred_fallthru
          _
        // Predicated region
        $region61: #{tpu_custom_call.1} parent=47 // pred_check
          %p871 = pneg %p252
        $region62: #{tpu_custom_call.1} parent=47 // pred_check_branch
          %873 = sbr.rel (%p871) target = $region64
        $region63: #{tpu_custom_call.1} parent=47 // pred_region
          %s874 = smul.u32 8, %s30
          %876 = vsyncadd %s832, 0
          %s877 = smul.addr %s874, 2
          %s878 = smul.addr %s877, 8
          %s879 = scalar_lea.hbm %s9, %s878
          %s880 = sshll.u32 %s835, 4
          %s881 = int_to_ptr.vmem [resolvable:$true] %s880
          %s882 = sshll.u32 %s879, 4
          %s883 = int_to_ptr.hbm [resolvable:$true] %s882
          %888 = dma.vmem_to_hbm [thread:$0]  %s881, 2048, %s883, %s832, 256, 256, 16
        $region64: #{tpu_custom_call.1} parent=47 // pred_fallthru
          _
      $region48: #{tpu_custom_call.1} parent=5 // pred_fallthru
        _
      %p889 = scmp.le.s32.totalorder 2, %s25
      // Predicated region
      $region65: #{tpu_custom_call.1} parent=5 // pred_check
        %p890 = pneg %p889
      $region66: #{tpu_custom_call.1} parent=5 // pred_check_branch
        %892 = sbr.rel (%p890) target = $region68
      $region67: #{tpu_custom_call.1} parent=5 // pred_region
        %s893 = ssub.s32 %s25, 2
        // Predicated region
        $region69: #{tpu_custom_call.1} parent=67 // pred_check
          %p894 = pneg %p206
        $region70: #{tpu_custom_call.1} parent=67 // pred_check_branch
          %896 = sbr.rel (%p894) target = $region72
        $region71: #{tpu_custom_call.1} parent=67 // pred_region
          %s897 = sand.u32 %s191, 1
          %s898 = scalar_lea.sflag [#allocation4], %s897
          %s899 = sand.u32 %s191, 1
          %s900 = smul.addr %s899, 64
          %s901 = scalar_lea.vmem [#allocation5], %s900
          %903 = dma.done %s898, 1024
        $region72: #{tpu_custom_call.1} parent=67 // pred_fallthru
          _
        // Predicated region
        $region73: #{tpu_custom_call.1} parent=67 // pred_check
          %p904 = pneg %p232
        $region74: #{tpu_custom_call.1} parent=67 // pred_check_branch
          %906 = sbr.rel (%p904) target = $region76
        $region75: #{tpu_custom_call.1} parent=67 // pred_region
          %s907 = sand.u32 %s31, 1
          %s908 = scalar_lea.sflag [#allocation7], %s907
          %s909 = sand.u32 %s217, 1
          %s910 = smul.addr %s909, 128
          %s911 = scalar_lea.vmem [#allocation6], %s910
          %913 = dma.done %s908, 2048
        $region76: #{tpu_custom_call.1} parent=67 // pred_fallthru
          _
        // Predicated region
        $region77: #{tpu_custom_call.1} parent=67 // pred_check
          %p914 = pneg %p258
        $region78: #{tpu_custom_call.1} parent=67 // pred_check_branch
          %916 = sbr.rel (%p914) target = $region80
        $region79: #{tpu_custom_call.1} parent=67 // pred_region
          %s917 = sand.u32 %s31, 1
          %s918 = scalar_lea.sflag [#allocation7], %s917
          %s919 = sand.u32 %s243, 1
          %s920 = smul.addr %s919, 128
          %s921 = scalar_lea.vmem [#allocation8], %s920
          %923 = dma.done %s918, 2048
        $region80: #{tpu_custom_call.1} parent=67 // pred_fallthru
          _
      $region68: #{tpu_custom_call.1} parent=5 // pred_fallthru
        _
    $region6: #{tpu_custom_call.1} parent=1 // loop_footer
      %s29 = sadd.s32 1, %s25
    $region7: #{tpu_custom_call.1} parent=1 // loop_footer_branch
      %24 = sbr.rel target = $region3
    $region8: #{tpu_custom_call.1} parent=1 // loop_exit
      _
    %924 = vsyncpa [#allocation3], 1
    %s925 = scalar_lea.sflag [#allocation3], 1
    %926 = vsyncpa %s925, 1
    %927 = vsyncpa [#allocation4], 1
    %s928 = scalar_lea.sflag [#allocation4], 1
    %929 = vsyncpa %s928, 1
    %930 = vsyncpa [#allocation7], 1
    %s931 = scalar_lea.sflag [#allocation7], 1
    %932 = vsyncpa %s931, 1

</llo_original>
